<compile_context>
chip_gen: v5e
topology: v5e:2x2
jax: 0.10.0
libtpu: 0.0.40
codegen_flags: <defaults>
</compile_context>

<pallas_src>
import functools

import jax
import jax.numpy as jnp
from jax.experimental import pallas as pl
from jax.experimental.pallas import tpu as pltpu

LANES = 128   # lane-dense output width
H_PAD = 8     # pooled-filter (Linear K) dim padded to one sublane tile


def cnnmax_kernel(x_ref, cw_ref, lp_ref, out_ref, *, filters, w_cov, h_out):
    """One batch tile of the fused CNNmax forward.

    x_ref  : (TB, L)        f32 VMEM  -- batch on sublanes, time on lanes
    cw_ref : (4*filters,)   f32 SMEM  -- [w(f,0),w(f,1),w(f,2)]*F ++ [b(f)]*F
    lp_ref : (16, LANES)    f32 VMEM  -- rows 0..7: linear weight (K x N), row 8: bias
    out_ref: (TB, LANES)    f32 VMEM
    """
    x = x_ref[...]
    tb = x.shape[0]

    # Three tap views of the time prefix covered by the maxpool windows (sliced once).
    a0 = x[:, 0:w_cov]
    a1 = x[:, 1:1 + w_cov]
    a2 = x[:, 2:2 + w_cov]

    # Per pool-window running max over (filters-in-window x covered-time).
    # Filter f belongs to exactly one stride-3 window: i = (f + 1) // 3.
    win_max = [None] * h_out
    for f in range(filters):
        w0 = cw_ref[3 * f + 0]
        w1 = cw_ref[3 * f + 1]
        w2 = cw_ref[3 * f + 2]
        bf = cw_ref[3 * filters + f]
        s = a0 * w0 + a1 * w1 + a2 * w2               # (TB, w_cov); bias/ReLU hoisted out
        m = jnp.max(s, axis=1, keepdims=True) + bf    # (TB, 1) time max (+ bias, const in t)
        i = (f + 1) // 3
        if i < h_out:  # filters past the last pool window (only when filters % 3 == 0)
            win_max[i] = m if win_max[i] is None else jnp.maximum(win_max[i], m)

    # ReLU commutes with both maxes (monotonic): apply on the tiny (TB, 1) columns, then
    # place column i in lane i of a zero-padded (TB, H_PAD) slab (zero K rows are inert).
    lane = jax.lax.broadcasted_iota(jnp.int32, (tb, H_PAD), 1)
    pooled = jnp.zeros((tb, H_PAD), jnp.float32)
    for i in range(h_out):
        if win_max[i] is not None:
            col = jnp.maximum(win_max[i], 0.0)          # ReLU
            pooled = jnp.where(lane == i, col, pooled)  # lane placement

    # Output Linear on the otherwise idle MXU: (TB, 8) x (8, 128) + bias row.
    lp = lp_ref[...]
    w_lin = lp[0:H_PAD, :]
    b_lin = lp[H_PAD:H_PAD + 1, :]
    out = jnp.dot(pooled, w_lin, preferred_element_type=jnp.float32) + b_lin
    out_ref[...] = out.astype(out_ref.dtype)


def cnnmax_forward(x, params, *, tb_target=512, vmem_budget=8 * 1024 * 1024):
    """x: (B, 1, L) float32, same layout as the PyTorch Conv1d input."""
    B, c_in, L = x.shape
    assert c_in == 1 and L >= 3
    conv_w = jnp.asarray(params["conv_w"], jnp.float32)   # (F, 3)
    conv_b = jnp.asarray(params["conv_b"], jnp.float32)   # (F,)
    lin_w = jnp.asarray(params["lin_w"], jnp.float32)     # (out, 6)  PyTorch Linear layout
    lin_b = jnp.asarray(params["lin_b"], jnp.float32)     # (out,)

    filters = conv_w.shape[0]
    out_size = lin_w.shape[0]
    t = L - 2                              # conv output length
    h_out = (filters - 1) // 3 + 1         # pooled filter dim (6 for filters=16)
    w_out = (t - 1) // 3 + 1               # pooled time dim
    w_cov = min(3 * w_out - 1, t)          # covered time prefix (off-by-one fixed)
    assert lin_w.shape[1] == h_out, "Linear in_features must equal pooled filter dim"
    assert h_out <= H_PAD and out_size <= LANES

    # Batch tile: full batch when B <= 8 (block == array dim), else a multiple of 8 sized
    # to keep the per-step working set (double-buffered x block + tap views + output) small.
    if B <= 8:
        tb = B
    else:
        row_bytes = 4 * (2 * L + 4 * w_cov + 2 * LANES)
        tb = max(8, min(tb_target, vmem_budget // max(row_bytes, 1), B))
        tb = (tb // 8) * 8
    grid = (pl.cdiv(B, tb),)

    x2d = x.reshape(B, L)                  # drop size-1 channel dim; no padding copy

    # Conv taps + bias packed into one tiny SMEM vector (scalar splats in-kernel).
    cw = jnp.concatenate([conv_w.reshape(-1), conv_b], axis=0)   # (4*filters,)

    # Linear weight/bias packed lane-dense into one small VMEM slab.
    lp = jnp.zeros((2 * H_PAD, LANES), jnp.float32)
    lp = lp.at[:h_out, :out_size].set(lin_w.T)
    lp = lp.at[H_PAD, :out_size].set(lin_b)

    flops = 2 * 3 * B * w_cov * filters + 2 * B * H_PAD * LANES
    bytes_accessed = 4 * (B * L + B * LANES + 2 * H_PAD * LANES + 4 * filters)

    kernel = functools.partial(cnnmax_kernel, filters=filters, w_cov=w_cov, h_out=h_out)
    out = pl.pallas_call(
        kernel,
        out_shape=jax.ShapeDtypeStruct((B, LANES), jnp.float32),
        grid=grid,
        in_specs=[
            pl.BlockSpec((tb, L), lambda i: (i, 0)),
            pl.BlockSpec(memory_space=pltpu.MemorySpace.SMEM),
            pl.BlockSpec((2 * H_PAD, LANES), lambda i: (0, 0)),
        ],
        out_specs=pl.BlockSpec((tb, LANES), lambda i: (i, 0)),
        compiler_params=pltpu.CompilerParams(
            dimension_semantics=("parallel",),
            vmem_limit_bytes=32 * 1024 * 1024,
        ),
        cost_estimate=pl.CostEstimate(flops=flops, transcendentals=0,
                                      bytes_accessed=bytes_accessed),
    )(x2d, cw, lp)
    return out[:, :out_size]


def init_params(key, filters=16, kernel_size=3, output_size=4):
    """Deterministic synthetic init (PyTorch-like uniform ranges, not a checkpoint)."""
    pool_out = (filters - 1) // 3 + 1          # = 6 for filters=16, matches Linear(6, out)
    k1, k2, k3, k4 = jax.random.split(key, 4)
    bound_c = 1.0 / (1 * kernel_size) ** 0.5   # Conv1d fan_in = in_channels * k
    bound_l = 1.0 / pool_out ** 0.5            # Linear fan_in = 6
    return {
        "conv_w": jax.random.uniform(k1, (filters, kernel_size), jnp.float32,
                                     minval=-bound_c, maxval=bound_c),
        "conv_b": jax.random.uniform(k2, (filters,), jnp.float32,
                                     minval=-bound_c, maxval=bound_c),
        "lin_w": jax.random.uniform(k3, (output_size, pool_out), jnp.float32,
                                    minval=-bound_l, maxval=bound_l),
        "lin_b": jax.random.uniform(k4, (output_size,), jnp.float32,
                                    minval=-bound_l, maxval=bound_l),
    }


def reference_forward(x, params):
    """Pure-JAX literal re-implementation of the PyTorch forward (for sanity check)."""
    conv_w = params["conv_w"][:, None, :]      # (F, 1, K) = OIH
    y = jax.lax.conv_general_dilated(
        x, conv_w, window_strides=(1,), padding="VALID",
        dimension_numbers=("NCH", "OIH", "NCH"))
    y = y + params["conv_b"][None, :, None]
    y = jnp.maximum(y, 0.0)                    # ReLU
    # MaxPool2d(kernel=3, stride=3, padding=1) over the last two dims, -inf padding.
    y = jax.lax.reduce_window(
        y, -jnp.inf, jax.lax.max,
        window_dimensions=(1, 3, 3), window_strides=(1, 3, 3),
        padding=((0, 0), (1, 1), (1, 1)))
    y = jnp.max(y, axis=2)                     # torch.max(x, dim=2)[0]
    return y @ params["lin_w"].T + params["lin_b"][None, :]


if __name__ == "__main__":
    key = jax.random.PRNGKey(0)
    filters, output_size = 16, 4

    key, kp = jax.random.split(key)
    params = init_params(kp, filters=filters, output_size=output_size)

    # Small case (single grid step, block == full batch dim).
    key, kx = jax.random.split(key)
    x_small = jax.random.normal(kx, (2, 1, 32), jnp.float32)
    out_small = jax.block_until_ready(cnnmax_forward(x_small, params))
    ref_small = reference_forward(x_small, params)
    assert out_small.shape == (2, output_size)
    assert jnp.allclose(out_small, ref_small, atol=1e-4, rtol=1e-4), "mismatch (small)"

    # Case exercising the batch grid + partial last block (B=20, TB=16 -> 2 grid steps).
    key, kx2 = jax.random.split(key)
    x_grid = jax.random.normal(kx2, (20, 1, 65), jnp.float32)
    out_grid = jax.block_until_ready(cnnmax_forward(x_grid, params))
    ref_grid = reference_forward(x_grid, params)
    assert out_grid.shape == (20, output_size)
    assert jnp.allclose(out_grid, ref_grid, atol=1e-4, rtol=1e-4), "mismatch (grid)"

    print("KERNEL_OK")
</pallas_src>

<mosaic_0001>
module attributes {stable_mosaic.version = 11 : i64} {
  func.func @cnnmax_kernel(%arg0: i32, %arg1: memref<2x32xf32, #tpu.memory_space<vmem>>, %arg2: memref<64xf32, #tpu.memory_space<smem>>, %arg3: memref<16x128xf32, #tpu.memory_space<vmem>>, %arg4: memref<2x128xf32, #tpu.memory_space<vmem>>) attributes {dimension_semantics = [#tpu.dimension_semantics<parallel>], iteration_bounds = array<i64: 1>, scalar_prefetch = 0 : i64, scratch_operands = 0 : i64, tpu.core_type = #tpu.core_type<tc>, window_params = [{transform_indices = @transform_0, window_bounds = array<i64: 2, 32>}, {transform_indices = @transform_1, window_bounds = array<i64: 64>}, {pipeline_mode = #tpu.pipeline_mode<synchronous>, transform_indices = @transform_2, window_bounds = array<i64: 16, 128>}, {transform_indices = @transform_3, window_bounds = array<i64: 2, 128>}]} {
    %c0 = arith.constant 0 : index
    %c0_0 = arith.constant 0 : index
    %0 = vector.load %arg1[%c0, %c0_0] : memref<2x32xf32, #tpu.memory_space<vmem>>, vector<2x32xf32>
    %1 = vector.extract_strided_slice %0 {offsets = [0, 0], sizes = [2, 29], strides = [1, 1]} : vector<2x32xf32> to vector<2x29xf32>
    %2 = vector.extract_strided_slice %0 {offsets = [0, 1], sizes = [2, 29], strides = [1, 1]} : vector<2x32xf32> to vector<2x29xf32>
    %3 = vector.extract_strided_slice %0 {offsets = [0, 2], sizes = [2, 29], strides = [1, 1]} : vector<2x32xf32> to vector<2x29xf32>
    %c0_1 = arith.constant 0 : index
    %4 = memref.load %arg2[%c0_1] : memref<64xf32, #tpu.memory_space<smem>>
    %c1 = arith.constant 1 : index
    %5 = memref.load %arg2[%c1] : memref<64xf32, #tpu.memory_space<smem>>
    %c2 = arith.constant 2 : index
    %6 = memref.load %arg2[%c2] : memref<64xf32, #tpu.memory_space<smem>>
    %c48 = arith.constant 48 : index
    %7 = memref.load %arg2[%c48] : memref<64xf32, #tpu.memory_space<smem>>
    %8 = vector.broadcast %4 : f32 to vector<2x29xf32>
    %9 = arith.mulf %1, %8 : vector<2x29xf32>
    %10 = vector.broadcast %5 : f32 to vector<2x29xf32>
    %11 = arith.mulf %2, %10 : vector<2x29xf32>
    %12 = arith.addf %9, %11 : vector<2x29xf32>
    %13 = vector.broadcast %6 : f32 to vector<2x29xf32>
    %14 = arith.mulf %3, %13 : vector<2x29xf32>
    %15 = arith.addf %12, %14 : vector<2x29xf32>
    %cst = arith.constant dense<0xFF800000> : vector<2xf32>
    %16 = vector.multi_reduction <maximumf>, %15, %cst [1] : vector<2x29xf32> to vector<2xf32>
    %17 = vector.shape_cast %16 : vector<2xf32> to vector<2x1xf32>
    %18 = vector.broadcast %7 : f32 to vector<2x1xf32>
    %19 = arith.addf %17, %18 : vector<2x1xf32>
    %c3 = arith.constant 3 : index
    %20 = memref.load %arg2[%c3] : memref<64xf32, #tpu.memory_space<smem>>
    %c4 = arith.constant 4 : index
    %21 = memref.load %arg2[%c4] : memref<64xf32, #tpu.memory_space<smem>>
    %c5 = arith.constant 5 : index
    %22 = memref.load %arg2[%c5] : memref<64xf32, #tpu.memory_space<smem>>
    %c49 = arith.constant 49 : index
    %23 = memref.load %arg2[%c49] : memref<64xf32, #tpu.memory_space<smem>>
    %24 = vector.broadcast %20 : f32 to vector<2x29xf32>
    %25 = arith.mulf %1, %24 : vector<2x29xf32>
    %26 = vector.broadcast %21 : f32 to vector<2x29xf32>
    %27 = arith.mulf %2, %26 : vector<2x29xf32>
    %28 = arith.addf %25, %27 : vector<2x29xf32>
    %29 = vector.broadcast %22 : f32 to vector<2x29xf32>
    %30 = arith.mulf %3, %29 : vector<2x29xf32>
    %31 = arith.addf %28, %30 : vector<2x29xf32>
    %cst_2 = arith.constant dense<0xFF800000> : vector<2xf32>
    %32 = vector.multi_reduction <maximumf>, %31, %cst_2 [1] : vector<2x29xf32> to vector<2xf32>
    %33 = vector.shape_cast %32 : vector<2xf32> to vector<2x1xf32>
    %34 = vector.broadcast %23 : f32 to vector<2x1xf32>
    %35 = arith.addf %33, %34 : vector<2x1xf32>
    %36 = arith.maximumf %19, %35 : vector<2x1xf32>
    %c6 = arith.constant 6 : index
    %37 = memref.load %arg2[%c6] : memref<64xf32, #tpu.memory_space<smem>>
    %c7 = arith.constant 7 : index
    %38 = memref.load %arg2[%c7] : memref<64xf32, #tpu.memory_space<smem>>
    %c8 = arith.constant 8 : index
    %39 = memref.load %arg2[%c8] : memref<64xf32, #tpu.memory_space<smem>>
    %c50 = arith.constant 50 : index
    %40 = memref.load %arg2[%c50] : memref<64xf32, #tpu.memory_space<smem>>
    %41 = vector.broadcast %37 : f32 to vector<2x29xf32>
    %42 = arith.mulf %1, %41 : vector<2x29xf32>
    %43 = vector.broadcast %38 : f32 to vector<2x29xf32>
    %44 = arith.mulf %2, %43 : vector<2x29xf32>
    %45 = arith.addf %42, %44 : vector<2x29xf32>
    %46 = vector.broadcast %39 : f32 to vector<2x29xf32>
    %47 = arith.mulf %3, %46 : vector<2x29xf32>
    %48 = arith.addf %45, %47 : vector<2x29xf32>
    %cst_3 = arith.constant dense<0xFF800000> : vector<2xf32>
    %49 = vector.multi_reduction <maximumf>, %48, %cst_3 [1] : vector<2x29xf32> to vector<2xf32>
    %50 = vector.shape_cast %49 : vector<2xf32> to vector<2x1xf32>
    %51 = vector.broadcast %40 : f32 to vector<2x1xf32>
    %52 = arith.addf %50, %51 : vector<2x1xf32>
    %c9 = arith.constant 9 : index
    %53 = memref.load %arg2[%c9] : memref<64xf32, #tpu.memory_space<smem>>
    %c10 = arith.constant 10 : index
    %54 = memref.load %arg2[%c10] : memref<64xf32, #tpu.memory_space<smem>>
    %c11 = arith.constant 11 : index
    %55 = memref.load %arg2[%c11] : memref<64xf32, #tpu.memory_space<smem>>
    %c51 = arith.constant 51 : index
    %56 = memref.load %arg2[%c51] : memref<64xf32, #tpu.memory_space<smem>>
    %57 = vector.broadcast %53 : f32 to vector<2x29xf32>
    %58 = arith.mulf %1, %57 : vector<2x29xf32>
    %59 = vector.broadcast %54 : f32 to vector<2x29xf32>
    %60 = arith.mulf %2, %59 : vector<2x29xf32>
    %61 = arith.addf %58, %60 : vector<2x29xf32>
    %62 = vector.broadcast %55 : f32 to vector<2x29xf32>
    %63 = arith.mulf %3, %62 : vector<2x29xf32>
    %64 = arith.addf %61, %63 : vector<2x29xf32>
    %cst_4 = arith.constant dense<0xFF800000> : vector<2xf32>
    %65 = vector.multi_reduction <maximumf>, %64, %cst_4 [1] : vector<2x29xf32> to vector<2xf32>
    %66 = vector.shape_cast %65 : vector<2xf32> to vector<2x1xf32>
    %67 = vector.broadcast %56 : f32 to vector<2x1xf32>
    %68 = arith.addf %66, %67 : vector<2x1xf32>
    %69 = arith.maximumf %52, %68 : vector<2x1xf32>
    %c12 = arith.constant 12 : index
    %70 = memref.load %arg2[%c12] : memref<64xf32, #tpu.memory_space<smem>>
    %c13 = arith.constant 13 : index
    %71 = memref.load %arg2[%c13] : memref<64xf32, #tpu.memory_space<smem>>
    %c14 = arith.constant 14 : index
    %72 = memref.load %arg2[%c14] : memref<64xf32, #tpu.memory_space<smem>>
    %c52 = arith.constant 52 : index
    %73 = memref.load %arg2[%c52] : memref<64xf32, #tpu.memory_space<smem>>
    %74 = vector.broadcast %70 : f32 to vector<2x29xf32>
    %75 = arith.mulf %1, %74 : vector<2x29xf32>
    %76 = vector.broadcast %71 : f32 to vector<2x29xf32>
    %77 = arith.mulf %2, %76 : vector<2x29xf32>
    %78 = arith.addf %75, %77 : vector<2x29xf32>
    %79 = vector.broadcast %72 : f32 to vector<2x29xf32>
    %80 = arith.mulf %3, %79 : vector<2x29xf32>
    %81 = arith.addf %78, %80 : vector<2x29xf32>
    %cst_5 = arith.constant dense<0xFF800000> : vector<2xf32>
    %82 = vector.multi_reduction <maximumf>, %81, %cst_5 [1] : vector<2x29xf32> to vector<2xf32>
    %83 = vector.shape_cast %82 : vector<2xf32> to vector<2x1xf32>
    %84 = vector.broadcast %73 : f32 to vector<2x1xf32>
    %85 = arith.addf %83, %84 : vector<2x1xf32>
    %86 = arith.maximumf %69, %85 : vector<2x1xf32>
    %c15 = arith.constant 15 : index
    %87 = memref.load %arg2[%c15] : memref<64xf32, #tpu.memory_space<smem>>
    %c16 = arith.constant 16 : index
    %88 = memref.load %arg2[%c16] : memref<64xf32, #tpu.memory_space<smem>>
    %c17 = arith.constant 17 : index
    %89 = memref.load %arg2[%c17] : memref<64xf32, #tpu.memory_space<smem>>
    %c53 = arith.constant 53 : index
    %90 = memref.load %arg2[%c53] : memref<64xf32, #tpu.memory_space<smem>>
    %91 = vector.broadcast %87 : f32 to vector<2x29xf32>
    %92 = arith.mulf %1, %91 : vector<2x29xf32>
    %93 = vector.broadcast %88 : f32 to vector<2x29xf32>
    %94 = arith.mulf %2, %93 : vector<2x29xf32>
    %95 = arith.addf %92, %94 : vector<2x29xf32>
    %96 = vector.broadcast %89 : f32 to vector<2x29xf32>
    %97 = arith.mulf %3, %96 : vector<2x29xf32>
    %98 = arith.addf %95, %97 : vector<2x29xf32>
    %cst_6 = arith.constant dense<0xFF800000> : vector<2xf32>
    %99 = vector.multi_reduction <maximumf>, %98, %cst_6 [1] : vector<2x29xf32> to vector<2xf32>
    %100 = vector.shape_cast %99 : vector<2xf32> to vector<2x1xf32>
    %101 = vector.broadcast %90 : f32 to vector<2x1xf32>
    %102 = arith.addf %100, %101 : vector<2x1xf32>
    %c18 = arith.constant 18 : index
    %103 = memref.load %arg2[%c18] : memref<64xf32, #tpu.memory_space<smem>>
    %c19 = arith.constant 19 : index
    %104 = memref.load %arg2[%c19] : memref<64xf32, #tpu.memory_space<smem>>
    %c20 = arith.constant 20 : index
    %105 = memref.load %arg2[%c20] : memref<64xf32, #tpu.memory_space<smem>>
    %c54 = arith.constant 54 : index
    %106 = memref.load %arg2[%c54] : memref<64xf32, #tpu.memory_space<smem>>
    %107 = vector.broadcast %103 : f32 to vector<2x29xf32>
    %108 = arith.mulf %1, %107 : vector<2x29xf32>
    %109 = vector.broadcast %104 : f32 to vector<2x29xf32>
    %110 = arith.mulf %2, %109 : vector<2x29xf32>
    %111 = arith.addf %108, %110 : vector<2x29xf32>
    %112 = vector.broadcast %105 : f32 to vector<2x29xf32>
    %113 = arith.mulf %3, %112 : vector<2x29xf32>
    %114 = arith.addf %111, %113 : vector<2x29xf32>
    %cst_7 = arith.constant dense<0xFF800000> : vector<2xf32>
    %115 = vector.multi_reduction <maximumf>, %114, %cst_7 [1] : vector<2x29xf32> to vector<2xf32>
    %116 = vector.shape_cast %115 : vector<2xf32> to vector<2x1xf32>
    %117 = vector.broadcast %106 : f32 to vector<2x1xf32>
    %118 = arith.addf %116, %117 : vector<2x1xf32>
    %119 = arith.maximumf %102, %118 : vector<2x1xf32>
    %c21 = arith.constant 21 : index
    %120 = memref.load %arg2[%c21] : memref<64xf32, #tpu.memory_space<smem>>
    %c22 = arith.constant 22 : index
    %121 = memref.load %arg2[%c22] : memref<64xf32, #tpu.memory_space<smem>>
    %c23 = arith.constant 23 : index
    %122 = memref.load %arg2[%c23] : memref<64xf32, #tpu.memory_space<smem>>
    %c55 = arith.constant 55 : index
    %123 = memref.load %arg2[%c55] : memref<64xf32, #tpu.memory_space<smem>>
    %124 = vector.broadcast %120 : f32 to vector<2x29xf32>
    %125 = arith.mulf %1, %124 : vector<2x29xf32>
    %126 = vector.broadcast %121 : f32 to vector<2x29xf32>
    %127 = arith.mulf %2, %126 : vector<2x29xf32>
    %128 = arith.addf %125, %127 : vector<2x29xf32>
    %129 = vector.broadcast %122 : f32 to vector<2x29xf32>
    %130 = arith.mulf %3, %129 : vector<2x29xf32>
    %131 = arith.addf %128, %130 : vector<2x29xf32>
    %cst_8 = arith.constant dense<0xFF800000> : vector<2xf32>
    %132 = vector.multi_reduction <maximumf>, %131, %cst_8 [1] : vector<2x29xf32> to vector<2xf32>
    %133 = vector.shape_cast %132 : vector<2xf32> to vector<2x1xf32>
    %134 = vector.broadcast %123 : f32 to vector<2x1xf32>
    %135 = arith.addf %133, %134 : vector<2x1xf32>
    %136 = arith.maximumf %119, %135 : vector<2x1xf32>
    %c24 = arith.constant 24 : index
    %137 = memref.load %arg2[%c24] : memref<64xf32, #tpu.memory_space<smem>>
    %c25 = arith.constant 25 : index
    %138 = memref.load %arg2[%c25] : memref<64xf32, #tpu.memory_space<smem>>
    %c26 = arith.constant 26 : index
    %139 = memref.load %arg2[%c26] : memref<64xf32, #tpu.memory_space<smem>>
    %c56 = arith.constant 56 : index
    %140 = memref.load %arg2[%c56] : memref<64xf32, #tpu.memory_space<smem>>
    %141 = vector.broadcast %137 : f32 to vector<2x29xf32>
    %142 = arith.mulf %1, %141 : vector<2x29xf32>
    %143 = vector.broadcast %138 : f32 to vector<2x29xf32>
    %144 = arith.mulf %2, %143 : vector<2x29xf32>
    %145 = arith.addf %142, %144 : vector<2x29xf32>
    %146 = vector.broadcast %139 : f32 to vector<2x29xf32>
    %147 = arith.mulf %3, %146 : vector<2x29xf32>
    %148 = arith.addf %145, %147 : vector<2x29xf32>
    %cst_9 = arith.constant dense<0xFF800000> : vector<2xf32>
    %149 = vector.multi_reduction <maximumf>, %148, %cst_9 [1] : vector<2x29xf32> to vector<2xf32>
    %150 = vector.shape_cast %149 : vector<2xf32> to vector<2x1xf32>
    %151 = vector.broadcast %140 : f32 to vector<2x1xf32>
    %152 = arith.addf %150, %151 : vector<2x1xf32>
    %c27 = arith.constant 27 : index
    %153 = memref.load %arg2[%c27] : memref<64xf32, #tpu.memory_space<smem>>
    %c28 = arith.constant 28 : index
    %154 = memref.load %arg2[%c28] : memref<64xf32, #tpu.memory_space<smem>>
    %c29 = arith.constant 29 : index
    %155 = memref.load %arg2[%c29] : memref<64xf32, #tpu.memory_space<smem>>
    %c57 = arith.constant 57 : index
    %156 = memref.load %arg2[%c57] : memref<64xf32, #tpu.memory_space<smem>>
    %157 = vector.broadcast %153 : f32 to vector<2x29xf32>
    %158 = arith.mulf %1, %157 : vector<2x29xf32>
    %159 = vector.broadcast %154 : f32 to vector<2x29xf32>
    %160 = arith.mulf %2, %159 : vector<2x29xf32>
    %161 = arith.addf %158, %160 : vector<2x29xf32>
    %162 = vector.broadcast %155 : f32 to vector<2x29xf32>
    %163 = arith.mulf %3, %162 : vector<2x29xf32>
    %164 = arith.addf %161, %163 : vector<2x29xf32>
    %cst_10 = arith.constant dense<0xFF800000> : vector<2xf32>
    %165 = vector.multi_reduction <maximumf>, %164, %cst_10 [1] : vector<2x29xf32> to vector<2xf32>
    %166 = vector.shape_cast %165 : vector<2xf32> to vector<2x1xf32>
    %167 = vector.broadcast %156 : f32 to vector<2x1xf32>
    %168 = arith.addf %166, %167 : vector<2x1xf32>
    %169 = arith.maximumf %152, %168 : vector<2x1xf32>
    %c30 = arith.constant 30 : index
    %170 = memref.load %arg2[%c30] : memref<64xf32, #tpu.memory_space<smem>>
    %c31 = arith.constant 31 : index
    %171 = memref.load %arg2[%c31] : memref<64xf32, #tpu.memory_space<smem>>
    %c32 = arith.constant 32 : index
    %172 = memref.load %arg2[%c32] : memref<64xf32, #tpu.memory_space<smem>>
    %c58 = arith.constant 58 : index
    %173 = memref.load %arg2[%c58] : memref<64xf32, #tpu.memory_space<smem>>
    %174 = vector.broadcast %170 : f32 to vector<2x29xf32>
    %175 = arith.mulf %1, %174 : vector<2x29xf32>
    %176 = vector.broadcast %171 : f32 to vector<2x29xf32>
    %177 = arith.mulf %2, %176 : vector<2x29xf32>
    %178 = arith.addf %175, %177 : vector<2x29xf32>
    %179 = vector.broadcast %172 : f32 to vector<2x29xf32>
    %180 = arith.mulf %3, %179 : vector<2x29xf32>
    %181 = arith.addf %178, %180 : vector<2x29xf32>
    %cst_11 = arith.constant dense<0xFF800000> : vector<2xf32>
    %182 = vector.multi_reduction <maximumf>, %181, %cst_11 [1] : vector<2x29xf32> to vector<2xf32>
    %183 = vector.shape_cast %182 : vector<2xf32> to vector<2x1xf32>
    %184 = vector.broadcast %173 : f32 to vector<2x1xf32>
    %185 = arith.addf %183, %184 : vector<2x1xf32>
    %186 = arith.maximumf %169, %185 : vector<2x1xf32>
    %c33 = arith.constant 33 : index
    %187 = memref.load %arg2[%c33] : memref<64xf32, #tpu.memory_space<smem>>
    %c34 = arith.constant 34 : index
    %188 = memref.load %arg2[%c34] : memref<64xf32, #tpu.memory_space<smem>>
    %c35 = arith.constant 35 : index
    %189 = memref.load %arg2[%c35] : memref<64xf32, #tpu.memory_space<smem>>
    %c59 = arith.constant 59 : index
    %190 = memref.load %arg2[%c59] : memref<64xf32, #tpu.memory_space<smem>>
    %191 = vector.broadcast %187 : f32 to vector<2x29xf32>
    %192 = arith.mulf %1, %191 : vector<2x29xf32>
    %193 = vector.broadcast %188 : f32 to vector<2x29xf32>
    %194 = arith.mulf %2, %193 : vector<2x29xf32>
    %195 = arith.addf %192, %194 : vector<2x29xf32>
    %196 = vector.broadcast %189 : f32 to vector<2x29xf32>
    %197 = arith.mulf %3, %196 : vector<2x29xf32>
    %198 = arith.addf %195, %197 : vector<2x29xf32>
    %cst_12 = arith.constant dense<0xFF800000> : vector<2xf32>
    %199 = vector.multi_reduction <maximumf>, %198, %cst_12 [1] : vector<2x29xf32> to vector<2xf32>
    %200 = vector.shape_cast %199 : vector<2xf32> to vector<2x1xf32>
    %201 = vector.broadcast %190 : f32 to vector<2x1xf32>
    %202 = arith.addf %200, %201 : vector<2x1xf32>
    %c36 = arith.constant 36 : index
    %203 = memref.load %arg2[%c36] : memref<64xf32, #tpu.memory_space<smem>>
    %c37 = arith.constant 37 : index
    %204 = memref.load %arg2[%c37] : memref<64xf32, #tpu.memory_space<smem>>
    %c38 = arith.constant 38 : index
    %205 = memref.load %arg2[%c38] : memref<64xf32, #tpu.memory_space<smem>>
    %c60 = arith.constant 60 : index
    %206 = memref.load %arg2[%c60] : memref<64xf32, #tpu.memory_space<smem>>
    %207 = vector.broadcast %203 : f32 to vector<2x29xf32>
    %208 = arith.mulf %1, %207 : vector<2x29xf32>
    %209 = vector.broadcast %204 : f32 to vector<2x29xf32>
    %210 = arith.mulf %2, %209 : vector<2x29xf32>
    %211 = arith.addf %208, %210 : vector<2x29xf32>
    %212 = vector.broadcast %205 : f32 to vector<2x29xf32>
    %213 = arith.mulf %3, %212 : vector<2x29xf32>
    %214 = arith.addf %211, %213 : vector<2x29xf32>
    %cst_13 = arith.constant dense<0xFF800000> : vector<2xf32>
    %215 = vector.multi_reduction <maximumf>, %214, %cst_13 [1] : vector<2x29xf32> to vector<2xf32>
    %216 = vector.shape_cast %215 : vector<2xf32> to vector<2x1xf32>
    %217 = vector.broadcast %206 : f32 to vector<2x1xf32>
    %218 = arith.addf %216, %217 : vector<2x1xf32>
    %219 = arith.maximumf %202, %218 : vector<2x1xf32>
    %c39 = arith.constant 39 : index
    %220 = memref.load %arg2[%c39] : memref<64xf32, #tpu.memory_space<smem>>
    %c40 = arith.constant 40 : index
    %221 = memref.load %arg2[%c40] : memref<64xf32, #tpu.memory_space<smem>>
    %c41 = arith.constant 41 : index
    %222 = memref.load %arg2[%c41] : memref<64xf32, #tpu.memory_space<smem>>
    %c61 = arith.constant 61 : index
    %223 = memref.load %arg2[%c61] : memref<64xf32, #tpu.memory_space<smem>>
    %224 = vector.broadcast %220 : f32 to vector<2x29xf32>
    %225 = arith.mulf %1, %224 : vector<2x29xf32>
    %226 = vector.broadcast %221 : f32 to vector<2x29xf32>
    %227 = arith.mulf %2, %226 : vector<2x29xf32>
    %228 = arith.addf %225, %227 : vector<2x29xf32>
    %229 = vector.broadcast %222 : f32 to vector<2x29xf32>
    %230 = arith.mulf %3, %229 : vector<2x29xf32>
    %231 = arith.addf %228, %230 : vector<2x29xf32>
    %cst_14 = arith.constant dense<0xFF800000> : vector<2xf32>
    %232 = vector.multi_reduction <maximumf>, %231, %cst_14 [1] : vector<2x29xf32> to vector<2xf32>
    %233 = vector.shape_cast %232 : vector<2xf32> to vector<2x1xf32>
    %234 = vector.broadcast %223 : f32 to vector<2x1xf32>
    %235 = arith.addf %233, %234 : vector<2x1xf32>
    %236 = arith.maximumf %219, %235 : vector<2x1xf32>
    %c42 = arith.constant 42 : index
    %237 = memref.load %arg2[%c42] : memref<64xf32, #tpu.memory_space<smem>>
    %c43 = arith.constant 43 : index
    %238 = memref.load %arg2[%c43] : memref<64xf32, #tpu.memory_space<smem>>
    %c44 = arith.constant 44 : index
    %239 = memref.load %arg2[%c44] : memref<64xf32, #tpu.memory_space<smem>>
    %c62 = arith.constant 62 : index
    %240 = memref.load %arg2[%c62] : memref<64xf32, #tpu.memory_space<smem>>
    %241 = vector.broadcast %237 : f32 to vector<2x29xf32>
    %242 = arith.mulf %1, %241 : vector<2x29xf32>
    %243 = vector.broadcast %238 : f32 to vector<2x29xf32>
    %244 = arith.mulf %2, %243 : vector<2x29xf32>
    %245 = arith.addf %242, %244 : vector<2x29xf32>
    %246 = vector.broadcast %239 : f32 to vector<2x29xf32>
    %247 = arith.mulf %3, %246 : vector<2x29xf32>
    %248 = arith.addf %245, %247 : vector<2x29xf32>
    %cst_15 = arith.constant dense<0xFF800000> : vector<2xf32>
    %249 = vector.multi_reduction <maximumf>, %248, %cst_15 [1] : vector<2x29xf32> to vector<2xf32>
    %250 = vector.shape_cast %249 : vector<2xf32> to vector<2x1xf32>
    %251 = vector.broadcast %240 : f32 to vector<2x1xf32>
    %252 = arith.addf %250, %251 : vector<2x1xf32>
    %c45 = arith.constant 45 : index
    %253 = memref.load %arg2[%c45] : memref<64xf32, #tpu.memory_space<smem>>
    %c46 = arith.constant 46 : index
    %254 = memref.load %arg2[%c46] : memref<64xf32, #tpu.memory_space<smem>>
    %c47 = arith.constant 47 : index
    %255 = memref.load %arg2[%c47] : memref<64xf32, #tpu.memory_space<smem>>
    %c63 = arith.constant 63 : index
    %256 = memref.load %arg2[%c63] : memref<64xf32, #tpu.memory_space<smem>>
    %257 = vector.broadcast %253 : f32 to vector<2x29xf32>
    %258 = arith.mulf %1, %257 : vector<2x29xf32>
    %259 = vector.broadcast %254 : f32 to vector<2x29xf32>
    %260 = arith.mulf %2, %259 : vector<2x29xf32>
    %261 = arith.addf %258, %260 : vector<2x29xf32>
    %262 = vector.broadcast %255 : f32 to vector<2x29xf32>
    %263 = arith.mulf %3, %262 : vector<2x29xf32>
    %264 = arith.addf %261, %263 : vector<2x29xf32>
    %cst_16 = arith.constant dense<0xFF800000> : vector<2xf32>
    %265 = vector.multi_reduction <maximumf>, %264, %cst_16 [1] : vector<2x29xf32> to vector<2xf32>
    %266 = vector.shape_cast %265 : vector<2xf32> to vector<2x1xf32>
    %267 = vector.broadcast %256 : f32 to vector<2x1xf32>
    %268 = arith.addf %266, %267 : vector<2x1xf32>
    %269 = arith.maximumf %252, %268 : vector<2x1xf32>
    %270 = tpu.iota {dimensions = array<i32: 1>} : vector<2x8xi32>
    %cst_17 = arith.constant 0.000000e+00 : f32
    %271 = vector.broadcast %cst_17 : f32 to vector<2x8xf32>
    %cst_18 = arith.constant 0.000000e+00 : f32
    %272 = vector.broadcast %cst_18 : f32 to vector<2x1xf32>
    %273 = arith.maximumf %36, %272 : vector<2x1xf32>
    %c0_i32 = arith.constant 0 : i32
    %274 = vector.broadcast %c0_i32 : i32 to vector<2x8xi32>
    %275 = arith.cmpi eq, %270, %274 : vector<2x8xi32>
    %276 = vector.shape_cast %273 : vector<2x1xf32> to vector<2x1xf32>
    %277 = vector.broadcast %276 : vector<2x1xf32> to vector<2x8xf32>
    %278 = arith.select %275, %277, %271 : vector<2x8xi1>, vector<2x8xf32>
    %cst_19 = arith.constant 0.000000e+00 : f32
    %279 = vector.broadcast %cst_19 : f32 to vector<2x1xf32>
    %280 = arith.maximumf %86, %279 : vector<2x1xf32>
    %c1_i32 = arith.constant 1 : i32
    %281 = vector.broadcast %c1_i32 : i32 to vector<2x8xi32>
    %282 = arith.cmpi eq, %270, %281 : vector<2x8xi32>
    %283 = vector.shape_cast %280 : vector<2x1xf32> to vector<2x1xf32>
    %284 = vector.broadcast %283 : vector<2x1xf32> to vector<2x8xf32>
    %285 = arith.select %282, %284, %278 : vector<2x8xi1>, vector<2x8xf32>
    %cst_20 = arith.constant 0.000000e+00 : f32
    %286 = vector.broadcast %cst_20 : f32 to vector<2x1xf32>
    %287 = arith.maximumf %136, %286 : vector<2x1xf32>
    %c2_i32 = arith.constant 2 : i32
    %288 = vector.broadcast %c2_i32 : i32 to vector<2x8xi32>
    %289 = arith.cmpi eq, %270, %288 : vector<2x8xi32>
    %290 = vector.shape_cast %287 : vector<2x1xf32> to vector<2x1xf32>
    %291 = vector.broadcast %290 : vector<2x1xf32> to vector<2x8xf32>
    %292 = arith.select %289, %291, %285 : vector<2x8xi1>, vector<2x8xf32>
    %cst_21 = arith.constant 0.000000e+00 : f32
    %293 = vector.broadcast %cst_21 : f32 to vector<2x1xf32>
    %294 = arith.maximumf %186, %293 : vector<2x1xf32>
    %c3_i32 = arith.constant 3 : i32
    %295 = vector.broadcast %c3_i32 : i32 to vector<2x8xi32>
    %296 = arith.cmpi eq, %270, %295 : vector<2x8xi32>
    %297 = vector.shape_cast %294 : vector<2x1xf32> to vector<2x1xf32>
    %298 = vector.broadcast %297 : vector<2x1xf32> to vector<2x8xf32>
    %299 = arith.select %296, %298, %292 : vector<2x8xi1>, vector<2x8xf32>
    %cst_22 = arith.constant 0.000000e+00 : f32
    %300 = vector.broadcast %cst_22 : f32 to vector<2x1xf32>
    %301 = arith.maximumf %236, %300 : vector<2x1xf32>
    %c4_i32 = arith.constant 4 : i32
    %302 = vector.broadcast %c4_i32 : i32 to vector<2x8xi32>
    %303 = arith.cmpi eq, %270, %302 : vector<2x8xi32>
    %304 = vector.shape_cast %301 : vector<2x1xf32> to vector<2x1xf32>
    %305 = vector.broadcast %304 : vector<2x1xf32> to vector<2x8xf32>
    %306 = arith.select %303, %305, %299 : vector<2x8xi1>, vector<2x8xf32>
    %cst_23 = arith.constant 0.000000e+00 : f32
    %307 = vector.broadcast %cst_23 : f32 to vector<2x1xf32>
    %308 = arith.maximumf %269, %307 : vector<2x1xf32>
    %c5_i32 = arith.constant 5 : i32
    %309 = vector.broadcast %c5_i32 : i32 to vector<2x8xi32>
    %310 = arith.cmpi eq, %270, %309 : vector<2x8xi32>
    %311 = vector.shape_cast %308 : vector<2x1xf32> to vector<2x1xf32>
    %312 = vector.broadcast %311 : vector<2x1xf32> to vector<2x8xf32>
    %313 = arith.select %310, %312, %306 : vector<2x8xi1>, vector<2x8xf32>
    %c0_24 = arith.constant 0 : index
    %c0_25 = arith.constant 0 : index
    %314 = vector.load %arg3[%c0_24, %c0_25] : memref<16x128xf32, #tpu.memory_space<vmem>>, vector<16x128xf32>
    %315 = vector.extract_strided_slice %314 {offsets = [0, 0], sizes = [8, 128], strides = [1, 1]} : vector<16x128xf32> to vector<8x128xf32>
    %316 = vector.extract_strided_slice %314 {offsets = [8, 0], sizes = [1, 128], strides = [1, 1]} : vector<16x128xf32> to vector<1x128xf32>
    %cst_26 = arith.constant dense<0.000000e+00> : vector<2x128xf32>
    %317 = tpu.matmul %313, %315, %cst_26 {dimension_numbers = #tpu.dot_dimension_numbers<[1], [0], [0], [1], [0, 0, 1, 1], [], []>} : vector<2x8xf32>, vector<8x128xf32>, vector<2x128xf32> -> vector<2x128xf32>
    %318 = vector.broadcast %316 : vector<1x128xf32> to vector<2x128xf32>
    %319 = arith.addf %317, %318 : vector<2x128xf32>
    %c0_27 = arith.constant 0 : index
    %c0_28 = arith.constant 0 : index
    %320 = vector.load %arg4[%c0_27, %c0_28] : memref<2x128xf32, #tpu.memory_space<vmem>>, vector<2x128xf32>
    tpu.vector_store %arg4[%c0_27, %c0_28], %319 {strides = array<i32>} : memref<2x128xf32, #tpu.memory_space<vmem>>, vector<2x128xf32>,
    return
  }
  func.func @transform_0(%arg0: i32) -> (i32, i32) {
    %c0_i32 = arith.constant 0 : i32
    %c0_i32_0 = arith.constant 0 : i32
    return %arg0, %c0_i32 : i32, i32
  }
  func.func @transform_1(%arg0: i32) -> i32 {
    %c0_i32 = arith.constant 0 : i32
    %c0_i32_0 = arith.constant 0 : i32
    return %c0_i32 : i32
  }
  func.func @transform_2(%arg0: i32) -> (i32, i32) {
    %c0_i32 = arith.constant 0 : i32
    %c0_i32_0 = arith.constant 0 : i32
    %c0_i32_1 = arith.constant 0 : i32
    return %c0_i32, %c0_i32_0 : i32, i32
  }
  func.func @transform_3(%arg0: i32) -> (i32, i32) {
    %c0_i32 = arith.constant 0 : i32
    %c0_i32_0 = arith.constant 0 : i32
    return %arg0, %c0_i32 : i32, i32
  }
}

</mosaic_0001>

<llo_original>
// kernel: tpu_custom_call.1
$region0: #{tpu_custom_call.1}
  #allocation0 [shape = 'u32[]', space=smem, size = 0x4, offset = 0x4, fixed_abs, tag = 'smem constant byte address 0x4 - core index']
  #allocation1 [shape = 'u32[72,128]{1,0:T(1,128)}', space=vmem, size = 0x9000, scoped, tag = 'internal scratch']
  %s0 = inlined_call_operand.hbm [shape: f32[2,32], index: 0, kind: input, shape index: {}]
  %s1 = inlined_call_operand.hbm [shape: f32[64], index: 1, kind: input, shape index: {}]
  %s2 = inlined_call_operand.hbm [shape: f32[16,128], index: 2, kind: input, shape index: {}]
  %s3 = inlined_call_operand.hbm [shape: f32[2,128], index: 3, kind: output, shape index: {}]
  %s4 = sld [smem:[#allocation0]]
  $region34: #{tpu_custom_call.1} parent=0
    _
  %s6 = ssub.s32 1, %s4
  %s7 = scalar_select 0, %s6, %s4
  $region1: #{tpu_custom_call.1} parent=0
    #allocation2 [shape = 'u8[1024]{0}', space=vmem, size = 0x400, scoped, tag = 'input window, operand 0, single buffered']
    #allocation3 [shape = 's32[1]{0}', space=sflag, size = 0x4, scoped, tag = 'scoped memory for tpu_custom_call.1']
    #allocation4 [shape = 's32[1]{0}', space=sflag, size = 0x4, scoped, tag = 'scoped memory for tpu_custom_call.1']
    #allocation5 [shape = 's32[1]{0}', space=sflag, size = 0x4, scoped, tag = 'scoped memory for tpu_custom_call.1']
    #allocation6 [shape = 'u8[512]{0}', space=smem, size = 0x200, scoped, tag = 'input window, operand 1, single buffered']
    #allocation7 [shape = 'u8[8192]{0}', space=vmem, size = 0x2000, scoped, tag = 'input window, operand 2, single buffered']
    #allocation8 [shape = 's32[1]{0}', space=sflag, size = 0x4, scoped, tag = 'scoped memory for tpu_custom_call.1']
    #allocation9 [shape = 'u8[1024]{0}', space=vmem, size = 0x400, scoped, tag = 'output window, operand 0, single buffered']
    %8 = vsyncpa [#allocation3], 0
    %9 = vsyncpa [#allocation5], 0
    %10 = vsyncpa [#allocation8], 0
    %11 = vsyncpa [#allocation4], 0
    // Predicated region
    $region2: #{tpu_custom_call.1} parent=1 // pred_check
      _
    $region3: #{tpu_custom_call.1} parent=1 // pred_check_branch
      %13 = sbr.rel (0) target = $region5
    $region4: #{tpu_custom_call.1} parent=1 // pred_region
      %15 = vsyncadd [#allocation3], 0
      %s17 = sshll.u32 %s0, 4
      %s18 = int_to_ptr.hbm [resolvable:$true] %s17
      %s19 = sshll.u32 [#allocation2], 4
      %s20 = int_to_ptr.vmem [resolvable:$true] %s19
      %22 = dma.hbm_to_vmem [thread:$0]  %s18, 32, %s20, [#allocation3]
    $region5: #{tpu_custom_call.1} parent=1 // pred_fallthru
      _
    // Predicated region
    $region6: #{tpu_custom_call.1} parent=1 // pred_check
      _
    $region7: #{tpu_custom_call.1} parent=1 // pred_check_branch
      %24 = sbr.rel (0) target = $region9
    $region8: #{tpu_custom_call.1} parent=1 // pred_region
      %26 = vsyncadd [#allocation5], 0
      %s28 = sshll.u32 %s1, 4
      %s29 = int_to_ptr.hbm [resolvable:$true] %s28
      %31 = dma.hbm_to_smem %s29, 16, [#allocation6], [#allocation5]
    $region9: #{tpu_custom_call.1} parent=1 // pred_fallthru
      _
    // Predicated region
    $region10: #{tpu_custom_call.1} parent=1 // pred_check
      _
    $region11: #{tpu_custom_call.1} parent=1 // pred_check_branch
      %33 = sbr.rel (0) target = $region13
    $region12: #{tpu_custom_call.1} parent=1 // pred_region
      %35 = vsyncadd [#allocation8], 0
      %s36 = sshll.u32 %s2, 4
      %s37 = int_to_ptr.hbm [resolvable:$true] %s36
      %s38 = sshll.u32 [#allocation7], 4
      %s39 = int_to_ptr.vmem [resolvable:$true] %s38
      %44 = dma.hbm_to_vmem [thread:$0]  %s37, 256, %s39, [#allocation8], 128, 128, 8
    $region13: #{tpu_custom_call.1} parent=1 // pred_fallthru
      _
    // Predicated region
    $region14: #{tpu_custom_call.1} parent=1 // pred_check
      _
    $region15: #{tpu_custom_call.1} parent=1 // pred_check_branch
      %46 = sbr.rel (0) target = $region17
    $region16: #{tpu_custom_call.1} parent=1 // pred_region
      %48 = dma.done [#allocation3], 32
    $region17: #{tpu_custom_call.1} parent=1 // pred_fallthru
      _
    // Predicated region
    $region18: #{tpu_custom_call.1} parent=1 // pred_check
      _
    $region19: #{tpu_custom_call.1} parent=1 // pred_check_branch
      %50 = sbr.rel (0) target = $region21
    $region20: #{tpu_custom_call.1} parent=1 // pred_region
      %52 = dma.done [#allocation5], 16
    $region21: #{tpu_custom_call.1} parent=1 // pred_fallthru
      _
    // Predicated region
    $region22: #{tpu_custom_call.1} parent=1 // pred_check
      _
    $region23: #{tpu_custom_call.1} parent=1 // pred_check_branch
      %54 = sbr.rel (0) target = $region25
    $region24: #{tpu_custom_call.1} parent=1 // pred_region
      %56 = dma.done [#allocation8], 256
    $region25: #{tpu_custom_call.1} parent=1 // pred_fallthru
      _
    %57 = sfence
    %v58 = vld [vmem:[#allocation2] sm:$0x3]
    %s59 = sld [smem:[#allocation6]]
    %s60 = sld [smem:[#allocation6 + $0x1]]
    %s61 = sld [smem:[#allocation6 + $0x2]]
    %s62 = sld [smem:[#allocation6 + $0x30]]
    %v63 = vstv %s59
    %v64 = vmul.f32 %v58, %v63
    %v65 = vstv %s60
    %v66 = vmul.f32 %v58, %v65
    %68 = vrot.lane.b32.xlu0 %v66, 127
    %v69 = vpop.permute.xlu0 %68
    %v71 = vadd.f32 %v64, %v69
    %v72 = vstv %s61
    %v73 = vmul.f32 %v58, %v72
    %75 = vrot.lane.b32.xlu0 %v73, 126
    %v76 = vpop.permute.xlu0 %75
    %v78 = vadd.f32 %v71, %v76
    %vm79 = vcmask 230400
    %v80 = vsel %vm79, %v78, -inf
    %81 = vmax.xlane.f32.xlu0 %v80
    %v82 = vpop.xlane.xlu0 %81
    %v83 = vstv %s62
    %v84 = vadd.f32 %v82, %v83
    %s85 = sld [smem:[#allocation6 + $0x3]]
    %s86 = sld [smem:[#allocation6 + $0x4]]
    %s87 = sld [smem:[#allocation6 + $0x5]]
    %s88 = sld [smem:[#allocation6 + $0x31]]
    %v89 = vstv %s85
    %v90 = vmul.f32 %v58, %v89
    %v91 = vstv %s86
    %v92 = vmul.f32 %v58, %v91
    %94 = vrot.lane.b32.xlu0 %v92, 127
    %v95 = vpop.permute.xlu0 %94
    %v97 = vadd.f32 %v90, %v95
    %v98 = vstv %s87
    %v99 = vmul.f32 %v58, %v98
    %101 = vrot.lane.b32.xlu0 %v99, 126
    %v102 = vpop.permute.xlu0 %101
    %v104 = vadd.f32 %v97, %v102
    %v105 = vsel %vm79, %v104, -inf
    %106 = vmax.xlane.f32.xlu0 %v105
    %v107 = vpop.xlane.xlu0 %106
    %v108 = vstv %s88
    %v109 = vadd.f32 %v107, %v108
    %v110 = vmax.f32 %v84, %v109
    %s111 = sld [smem:[#allocation6 + $0x6]]
    %s112 = sld [smem:[#allocation6 + $0x7]]
    %s113 = sld [smem:[#allocation6 + $0x8]]
    %s114 = sld [smem:[#allocation6 + $0x32]]
    %v115 = vstv %s111
    %v116 = vmul.f32 %v58, %v115
    %v117 = vstv %s112
    %v118 = vmul.f32 %v58, %v117
    %120 = vrot.lane.b32.xlu0 %v118, 127
    %v121 = vpop.permute.xlu0 %120
    %v123 = vadd.f32 %v116, %v121
    %v124 = vstv %s113
    %v125 = vmul.f32 %v58, %v124
    %127 = vrot.lane.b32.xlu0 %v125, 126
    %v128 = vpop.permute.xlu0 %127
    %v130 = vadd.f32 %v123, %v128
    %v131 = vsel %vm79, %v130, -inf
    %132 = vmax.xlane.f32.xlu0 %v131
    %v133 = vpop.xlane.xlu0 %132
    %v134 = vstv %s114
    %v135 = vadd.f32 %v133, %v134
    %s136 = sld [smem:[#allocation6 + $0x9]]
    %s137 = sld [smem:[#allocation6 + $0xa]]
    %s138 = sld [smem:[#allocation6 + $0xb]]
    %s139 = sld [smem:[#allocation6 + $0x33]]
    %v140 = vstv %s136
    %v141 = vmul.f32 %v58, %v140
    %v142 = vstv %s137
    %v143 = vmul.f32 %v58, %v142
    %145 = vrot.lane.b32.xlu0 %v143, 127
    %v146 = vpop.permute.xlu0 %145
    %v148 = vadd.f32 %v141, %v146
    %v149 = vstv %s138
    %v150 = vmul.f32 %v58, %v149
    %152 = vrot.lane.b32.xlu0 %v150, 126
    %v153 = vpop.permute.xlu0 %152
    %v155 = vadd.f32 %v148, %v153
    %v156 = vsel %vm79, %v155, -inf
    %157 = vmax.xlane.f32.xlu0 %v156
    %v158 = vpop.xlane.xlu0 %157
    %v159 = vstv %s139
    %v160 = vadd.f32 %v158, %v159
    %v161 = vmax.f32 %v135, %v160
    %s162 = sld [smem:[#allocation6 + $0xc]]
    %s163 = sld [smem:[#allocation6 + $0xd]]
    %s164 = sld [smem:[#allocation6 + $0xe]]
    %s165 = sld [smem:[#allocation6 + $0x34]]
    %v166 = vstv %s162
    %v167 = vmul.f32 %v58, %v166
    %v168 = vstv %s163
    %v169 = vmul.f32 %v58, %v168
    %171 = vrot.lane.b32.xlu0 %v169, 127
    %v172 = vpop.permute.xlu0 %171
    %v174 = vadd.f32 %v167, %v172
    %v175 = vstv %s164
    %v176 = vmul.f32 %v58, %v175
    %178 = vrot.lane.b32.xlu0 %v176, 126
    %v179 = vpop.permute.xlu0 %178
    %v181 = vadd.f32 %v174, %v179
    %v182 = vsel %vm79, %v181, -inf
    %183 = vmax.xlane.f32.xlu0 %v182
    %v184 = vpop.xlane.xlu0 %183
    %v185 = vstv %s165
    %v186 = vadd.f32 %v184, %v185
    %v187 = vmax.f32 %v161, %v186
    %s188 = sld [smem:[#allocation6 + $0xf]]
    %s189 = sld [smem:[#allocation6 + $0x10]]
    %s190 = sld [smem:[#allocation6 + $0x11]]
    %s191 = sld [smem:[#allocation6 + $0x35]]
    %v192 = vstv %s188
    %v193 = vmul.f32 %v58, %v192
    %v194 = vstv %s189
    %v195 = vmul.f32 %v58, %v194
    %197 = vrot.lane.b32.xlu0 %v195, 127
    %v198 = vpop.permute.xlu0 %197
    %v200 = vadd.f32 %v193, %v198
    %v201 = vstv %s190
    %v202 = vmul.f32 %v58, %v201
    %204 = vrot.lane.b32.xlu0 %v202, 126
    %v205 = vpop.permute.xlu0 %204
    %v207 = vadd.f32 %v200, %v205
    %v208 = vsel %vm79, %v207, -inf
    %209 = vmax.xlane.f32.xlu0 %v208
    %v210 = vpop.xlane.xlu0 %209
    %v211 = vstv %s191
    %v212 = vadd.f32 %v210, %v211
    %s213 = sld [smem:[#allocation6 + $0x12]]
    %s214 = sld [smem:[#allocation6 + $0x13]]
    %s215 = sld [smem:[#allocation6 + $0x14]]
    %s216 = sld [smem:[#allocation6 + $0x36]]
    %v217 = vstv %s213
    %v218 = vmul.f32 %v58, %v217
    %v219 = vstv %s214
    %v220 = vmul.f32 %v58, %v219
    %222 = vrot.lane.b32.xlu0 %v220, 127
    %v223 = vpop.permute.xlu0 %222
    %v225 = vadd.f32 %v218, %v223
    %v226 = vstv %s215
    %v227 = vmul.f32 %v58, %v226
    %229 = vrot.lane.b32.xlu0 %v227, 126
    %v230 = vpop.permute.xlu0 %229
    %v232 = vadd.f32 %v225, %v230
    %v233 = vsel %vm79, %v232, -inf
    %234 = vmax.xlane.f32.xlu0 %v233
    %v235 = vpop.xlane.xlu0 %234
    %v236 = vstv %s216
    %v237 = vadd.f32 %v235, %v236
    %v238 = vmax.f32 %v212, %v237
    %s239 = sld [smem:[#allocation6 + $0x15]]
    %s240 = sld [smem:[#allocation6 + $0x16]]
    %s241 = sld [smem:[#allocation6 + $0x17]]
    %s242 = sld [smem:[#allocation6 + $0x37]]
    %v243 = vstv %s239
    %v244 = vmul.f32 %v58, %v243
    %v245 = vstv %s240
    %v246 = vmul.f32 %v58, %v245
    %248 = vrot.lane.b32.xlu0 %v246, 127
    %v249 = vpop.permute.xlu0 %248
    %v251 = vadd.f32 %v244, %v249
    %v252 = vstv %s241
    %v253 = vmul.f32 %v58, %v252
    %255 = vrot.lane.b32.xlu0 %v253, 126
    %v256 = vpop.permute.xlu0 %255
    %v258 = vadd.f32 %v251, %v256
    %v259 = vsel %vm79, %v258, -inf
    %260 = vmax.xlane.f32.xlu0 %v259
    %v261 = vpop.xlane.xlu0 %260
    %v262 = vstv %s242
    %v263 = vadd.f32 %v261, %v262
    %v264 = vmax.f32 %v238, %v263
    %s265 = sld [smem:[#allocation6 + $0x18]]
    %s266 = sld [smem:[#allocation6 + $0x19]]
    %s267 = sld [smem:[#allocation6 + $0x1a]]
    %s268 = sld [smem:[#allocation6 + $0x38]]
    %v269 = vstv %s265
    %v270 = vmul.f32 %v58, %v269
    %v271 = vstv %s266
    %v272 = vmul.f32 %v58, %v271
    %274 = vrot.lane.b32.xlu0 %v272, 127
    %v275 = vpop.permute.xlu0 %274
    %v277 = vadd.f32 %v270, %v275
    %v278 = vstv %s267
    %v279 = vmul.f32 %v58, %v278
    %281 = vrot.lane.b32.xlu0 %v279, 126
    %v282 = vpop.permute.xlu0 %281
    %v284 = vadd.f32 %v277, %v282
    %v285 = vsel %vm79, %v284, -inf
    %286 = vmax.xlane.f32.xlu0 %v285
    %v287 = vpop.xlane.xlu0 %286
    %v288 = vstv %s268
    %v289 = vadd.f32 %v287, %v288
    %s290 = sld [smem:[#allocation6 + $0x1b]]
    %s291 = sld [smem:[#allocation6 + $0x1c]]
    %s292 = sld [smem:[#allocation6 + $0x1d]]
    %s293 = sld [smem:[#allocation6 + $0x39]]
    %v294 = vstv %s290
    %v295 = vmul.f32 %v58, %v294
    %v296 = vstv %s291
    %v297 = vmul.f32 %v58, %v296
    %299 = vrot.lane.b32.xlu0 %v297, 127
    %v300 = vpop.permute.xlu0 %299
    %v302 = vadd.f32 %v295, %v300
    %v303 = vstv %s292
    %v304 = vmul.f32 %v58, %v303
    %306 = vrot.lane.b32.xlu0 %v304, 126
    %v307 = vpop.permute.xlu0 %306
    %v309 = vadd.f32 %v302, %v307
    %v310 = vsel %vm79, %v309, -inf
    %311 = vmax.xlane.f32.xlu0 %v310
    %v312 = vpop.xlane.xlu0 %311
    %v313 = vstv %s293
    %v314 = vadd.f32 %v312, %v313
    %v315 = vmax.f32 %v289, %v314
    %s316 = sld [smem:[#allocation6 + $0x1e]]
    %s317 = sld [smem:[#allocation6 + $0x1f]]
    %s318 = sld [smem:[#allocation6 + $0x20]]
    %s319 = sld [smem:[#allocation6 + $0x3a]]
    %v320 = vstv %s316
    %v321 = vmul.f32 %v58, %v320
    %v322 = vstv %s317
    %v323 = vmul.f32 %v58, %v322
    %325 = vrot.lane.b32.xlu0 %v323, 127
    %v326 = vpop.permute.xlu0 %325
    %v328 = vadd.f32 %v321, %v326
    %v329 = vstv %s318
    %v330 = vmul.f32 %v58, %v329
    %332 = vrot.lane.b32.xlu0 %v330, 126
    %v333 = vpop.permute.xlu0 %332
    %v335 = vadd.f32 %v328, %v333
    %v336 = vsel %vm79, %v335, -inf
    %337 = vmax.xlane.f32.xlu0 %v336
    %v338 = vpop.xlane.xlu0 %337
    %v339 = vstv %s319
    %v340 = vadd.f32 %v338, %v339
    %v341 = vmax.f32 %v315, %v340
    %s342 = sld [smem:[#allocation6 + $0x21]]
    %s343 = sld [smem:[#allocation6 + $0x22]]
    %s344 = sld [smem:[#allocation6 + $0x23]]
    %s345 = sld [smem:[#allocation6 + $0x3b]]
    %v346 = vstv %s342
    %v347 = vmul.f32 %v58, %v346
    %v348 = vstv %s343
    %v349 = vmul.f32 %v58, %v348
    %351 = vrot.lane.b32.xlu0 %v349, 127
    %v352 = vpop.permute.xlu0 %351
    %v354 = vadd.f32 %v347, %v352
    %v355 = vstv %s344
    %v356 = vmul.f32 %v58, %v355
    %358 = vrot.lane.b32.xlu0 %v356, 126
    %v359 = vpop.permute.xlu0 %358
    %v361 = vadd.f32 %v354, %v359
    %v362 = vsel %vm79, %v361, -inf
    %363 = vmax.xlane.f32.xlu0 %v362
    %v364 = vpop.xlane.xlu0 %363
    %v365 = vstv %s345
    %v366 = vadd.f32 %v364, %v365
    %s367 = sld [smem:[#allocation6 + $0x24]]
    %s368 = sld [smem:[#allocation6 + $0x25]]
    %s369 = sld [smem:[#allocation6 + $0x26]]
    %s370 = sld [smem:[#allocation6 + $0x3c]]
    %v371 = vstv %s367
    %v372 = vmul.f32 %v58, %v371
    %v373 = vstv %s368
    %v374 = vmul.f32 %v58, %v373
    %376 = vrot.lane.b32.xlu0 %v374, 127
    %v377 = vpop.permute.xlu0 %376
    %v379 = vadd.f32 %v372, %v377
    %v380 = vstv %s369
    %v381 = vmul.f32 %v58, %v380
    %383 = vrot.lane.b32.xlu0 %v381, 126
    %v384 = vpop.permute.xlu0 %383
    %v386 = vadd.f32 %v379, %v384
    %v387 = vsel %vm79, %v386, -inf
    %388 = vmax.xlane.f32.xlu0 %v387
    %v389 = vpop.xlane.xlu0 %388
    %v390 = vstv %s370
    %v391 = vadd.f32 %v389, %v390
    %v392 = vmax.f32 %v366, %v391
    %s393 = sld [smem:[#allocation6 + $0x27]]
    %s394 = sld [smem:[#allocation6 + $0x28]]
    %s395 = sld [smem:[#allocation6 + $0x29]]
    %s396 = sld [smem:[#allocation6 + $0x3d]]
    %v397 = vstv %s393
    %v398 = vmul.f32 %v58, %v397
    %v399 = vstv %s394
    %v400 = vmul.f32 %v58, %v399
    %402 = vrot.lane.b32.xlu0 %v400, 127
    %v403 = vpop.permute.xlu0 %402
    %v405 = vadd.f32 %v398, %v403
    %v406 = vstv %s395
    %v407 = vmul.f32 %v58, %v406
    %409 = vrot.lane.b32.xlu0 %v407, 126
    %v410 = vpop.permute.xlu0 %409
    %v412 = vadd.f32 %v405, %v410
    %v413 = vsel %vm79, %v412, -inf
    %414 = vmax.xlane.f32.xlu0 %v413
    %v415 = vpop.xlane.xlu0 %414
    %v416 = vstv %s396
    %v417 = vadd.f32 %v415, %v416
    %v418 = vmax.f32 %v392, %v417
    %s419 = sld [smem:[#allocation6 + $0x2a]]
    %s420 = sld [smem:[#allocation6 + $0x2b]]
    %s421 = sld [smem:[#allocation6 + $0x2c]]
    %s422 = sld [smem:[#allocation6 + $0x3e]]
    %v423 = vstv %s419
    %v424 = vmul.f32 %v58, %v423
    %v425 = vstv %s420
    %v426 = vmul.f32 %v58, %v425
    %428 = vrot.lane.b32.xlu0 %v426, 127
    %v429 = vpop.permute.xlu0 %428
    %v431 = vadd.f32 %v424, %v429
    %v432 = vstv %s421
    %v433 = vmul.f32 %v58, %v432
    %435 = vrot.lane.b32.xlu0 %v433, 126
    %v436 = vpop.permute.xlu0 %435
    %v438 = vadd.f32 %v431, %v436
    %v439 = vsel %vm79, %v438, -inf
    %440 = vmax.xlane.f32.xlu0 %v439
    %v441 = vpop.xlane.xlu0 %440
    %v442 = vstv %s422
    %v443 = vadd.f32 %v441, %v442
    %s444 = sld [smem:[#allocation6 + $0x2d]]
    %s445 = sld [smem:[#allocation6 + $0x2e]]
    %s446 = sld [smem:[#allocation6 + $0x2f]]
    %s447 = sld [smem:[#allocation6 + $0x3f]]
    %v448 = vstv %s444
    %v449 = vmul.f32 %v58, %v448
    %v450 = vstv %s445
    %v451 = vmul.f32 %v58, %v450
    %453 = vrot.lane.b32.xlu0 %v451, 127
    %v454 = vpop.permute.xlu0 %453
    %v456 = vadd.f32 %v449, %v454
    %v457 = vstv %s446
    %v458 = vmul.f32 %v58, %v457
    %460 = vrot.lane.b32.xlu0 %v458, 126
    %v461 = vpop.permute.xlu0 %460
    %v463 = vadd.f32 %v456, %v461
    %v464 = vsel %vm79, %v463, -inf
    %465 = vmax.xlane.f32.xlu0 %v464
    %v466 = vpop.xlane.xlu0 %465
    %v467 = vstv %s447
    %v468 = vadd.f32 %v466, %v467
    %v469 = vmax.f32 %v443, %v468
    %v470 = vlaneseq
    %v471 = vand.u32 %v470, 127
    %v472 = vmax.f32 %v110, 0.0
    %vm473 = vcmp.eq.s32.totalorder %v471, 0
    %v474 = vsel %vm473, %v472, 0.0
    %v475 = vmax.f32 %v187, 0.0
    %vm476 = vcmp.eq.s32.totalorder %v471, 1
    %v477 = vsel %vm476, %v475, %v474
    %v478 = vmax.f32 %v264, 0.0
    %vm479 = vcmp.eq.s32.totalorder %v471, 2
    %v480 = vsel %vm479, %v478, %v477
    %v481 = vmax.f32 %v341, 0.0
    %vm482 = vcmp.eq.s32.totalorder %v471, 3
    %v483 = vsel %vm482, %v481, %v480
    %v484 = vmax.f32 %v418, 0.0
    %vm485 = vcmp.eq.s32.totalorder %v471, 4
    %v486 = vsel %vm485, %v484, %v483
    %v487 = vmax.f32 %v469, 0.0
    %vm488 = vcmp.eq.s32.totalorder %v471, 5
    %v489 = vsel %vm488, %v487, %v486
    %v490 = vld [vmem:[#allocation7] sm:$0xff]
    %v491 = vld [vmem:[#allocation7 + $0x8] sm:$0xff]
    %v492 = vperm.slane %v491, 0
    %vm493 = vcmask 64512
    %v495 = vsel %vm493, %v489, 0
    %497 = vmatpush.msra.mxu0 0.0
    %498 = vmatpush.msra.mxu0 0.0
    %499 = vmatpush.msra.mxu0 0.0
    %500 = vmatpush.msra.mxu0 0.0
    %501 = vmatpush.msra.mxu0 0.0
    %502 = vmatpush.msra.mxu0 0.0
    %503 = vmatpush.msra.mxu0 0.0
    %504 = vmatpush.msra.mxu0 0.0
    %505 = vmatpush.msra.mxu0 0.0
    %506 = vmatpush.msra.mxu0 0.0
    %507 = vmatpush.msra.mxu0 0.0
    %508 = vmatpush.msra.mxu0 0.0
    %509 = vmatpush.msra.mxu0 0.0
    %510 = vmatpush.msra.mxu0 0.0
    %511 = vmatpush.msra.mxu0 0.0
    %512 = vmatpush.msra.mxu0 %v490
    %513 = vmatmul.f32.gmra.mxu0 %v495
    %v514 = vpop.f32.mrf.mxu0
    %v515 = vadd.f32 %v492, %v514
    %516 = vdwg.mxu0
    %517 = vst [vmem:[#allocation9] sm:$0x3] %v515
    // Predicated region
    $region26: #{tpu_custom_call.1} parent=1 // pred_check
      _
    $region27: #{tpu_custom_call.1} parent=1 // pred_check_branch
      %519 = sbr.rel (0) target = $region29
    $region28: #{tpu_custom_call.1} parent=1 // pred_region
      %521 = vsyncadd [#allocation4], 0
      %s523 = sshll.u32 [#allocation9], 4
      %s524 = int_to_ptr.vmem [resolvable:$true] %s523
      %s525 = sshll.u32 %s3, 4
      %s526 = int_to_ptr.hbm [resolvable:$true] %s525
      %528 = dma.vmem_to_hbm [thread:$0]  %s524, 32, %s526, [#allocation4]
    $region29: #{tpu_custom_call.1} parent=1 // pred_fallthru
      _
    // Predicated region
    $region30: #{tpu_custom_call.1} parent=1 // pred_check
      _
    $region31: #{tpu_custom_call.1} parent=1 // pred_check_branch
      %530 = sbr.rel (0) target = $region33
    $region32: #{tpu_custom_call.1} parent=1 // pred_region
      %532 = dma.done [#allocation4], 32
    $region33: #{tpu_custom_call.1} parent=1 // pred_fallthru
      _
    %533 = vsyncpa [#allocation3], 1
    %534 = vsyncpa [#allocation8], 1
    %535 = vsyncpa [#allocation4], 1
    %536 = vsyncpa [#allocation5], 1

</llo_original>
